<compile_context>
chip_gen: v6e
topology: v6e:2x2x1
jax: 0.10.0
libtpu: 0.0.40
codegen_flags: <defaults>
</compile_context>

<pallas_src>
import functools
import math

import jax
import jax.numpy as jnp
from jax.experimental import pallas as pl
from jax.experimental.pallas import tpu as pltpu


def _layernorm_kernel(x_ref, alpha_ref, bias_ref, o_ref, *, eps: float):
    x = x_ref[...].astype(jnp.float32)               # (tile_rows, D)
    d = x.shape[-1]
    mean = jnp.mean(x, axis=-1, keepdims=True)
    diff = x - mean
    # torch.Tensor.std defaults to the UNBIASED estimator (divide by N-1);
    # the divide is a compile-time constant -> emit a multiply.
    var = jnp.sum(diff * diff, axis=-1, keepdims=True) * (1.0 / (d - 1))
    std = jnp.sqrt(var)
    # Per-row reciprocal on the EUP (separate VLIW slot) instead of a
    # per-element VPU divide; eps is added to std (PyTorch module semantics).
    inv = pl.reciprocal(std + eps, approx=True)       # (tile_rows, 1)
    alpha = alpha_ref[...].astype(jnp.float32)        # (1, D)
    bias = bias_ref[...].astype(jnp.float32)          # (1, D)
    y = diff * inv * alpha + bias
    o_ref[...] = y.astype(o_ref.dtype)


def _sublane_multiple(dtype) -> int:
    # Packed sublane tile: 8 rows for 32-bit, 16 for 16-bit, 32 for 8-bit.
    itemsize = jnp.dtype(dtype).itemsize
    return max(8, 32 // itemsize)


def _choose_tile_rows(rows: int, d: int, dtype, requested,
                      vmem_budget_bytes: int) -> int:
    mult = _sublane_multiple(dtype)
    itemsize = jnp.dtype(dtype).itemsize
    # Bytes held resident per block row: (input + output) x double buffer.
    bytes_per_row = 2 * 2 * d * itemsize
    max_rows_vmem = max(mult, (vmem_budget_bytes // bytes_per_row) // mult * mult)
    target = 1024 if requested is None else requested
    tile = max(mult, (min(target, max_rows_vmem) // mult) * mult)
    # No point tiling beyond the (sublane-rounded) total row count.
    rows_rounded = ((rows + mult - 1) // mult) * mult
    return min(tile, rows_rounded)


def layer_normalization(x, alpha, bias, *, eps: float = 1e-6,
                        tile_rows: int | None = None,
                        vmem_budget_bytes: int = 28 * 1024 * 1024):
    """LayerNormalization.forward: alpha*(x-mean)/(std+eps)+bias, reduction on dim=-1."""
    orig_shape = x.shape
    d = orig_shape[-1]
    assert d > 1, "unbiased std (ddof=1) requires feature_size > 1"
    rows = math.prod(orig_shape[:-1]) if len(orig_shape) > 1 else 1

    x2 = x.reshape(rows, d)
    alpha2 = alpha.reshape(1, d)
    bias2 = bias.reshape(1, d)

    tr = _choose_tile_rows(rows, d, x.dtype, tile_rows, vmem_budget_bytes)
    grid_rows = pl.cdiv(rows, tr)

    out = pl.pallas_call(
        functools.partial(_layernorm_kernel, eps=eps),
        out_shape=jax.ShapeDtypeStruct((rows, d), x.dtype),
        grid_spec=pltpu.PrefetchScalarGridSpec(
            num_scalar_prefetch=0,
            grid=(grid_rows,),
            in_specs=[
                pl.BlockSpec((tr, d), lambda i: (i, 0)),
                pl.BlockSpec((1, d), lambda i: (0, 0)),
                pl.BlockSpec((1, d), lambda i: (0, 0)),
            ],
            out_specs=pl.BlockSpec((tr, d), lambda i: (i, 0)),
        ),
        compiler_params=pltpu.CompilerParams(
            dimension_semantics=("parallel",),  # row axis shards across v7x's 2 TCs
        ),
    )(x2, alpha2, bias2)

    return out.reshape(orig_shape)


def encoder_forward(x, alpha, bias, mask=None, *, eps: float = 1e-6):
    """Encoder.forward: run layers, then the final LayerNormalization.

    # TODO(synk): the Encoder's `layers` is an unspecified nn.ModuleList (no
    # concrete layer architecture in the spec), so only the final
    # LayerNormalization is implemented here.
    """
    del mask
    return layer_normalization(x, alpha, bias, eps=eps)


if __name__ == "__main__":
    key = jax.random.PRNGKey(0)
    # Small shapes; hidden chosen as a multiple of 128 for lane-dense stores.
    batch, seq, hidden = 2, 8, 128

    x = jax.random.normal(key, (batch, seq, hidden), dtype=jnp.float32)
    # Deterministic parameter init matching nn.Parameter(torch.ones/zeros(feature_size)).
    alpha = jnp.ones((hidden,), dtype=jnp.float32)
    bias = jnp.zeros((hidden,), dtype=jnp.float32)

    y = encoder_forward(x, alpha, bias, eps=1e-6)
    y = jax.block_until_ready(y)

    # Reference in plain JAX (unbiased std, eps added to std).  Tolerance is
    # loosened slightly because the kernel uses the EUP approximate reciprocal.
    mean = jnp.mean(x, axis=-1, keepdims=True)
    std = jnp.std(x, axis=-1, keepdims=True, ddof=1)
    ref = alpha * (x - mean) / (std + 1e-6) + bias
    assert jnp.allclose(y, ref, atol=1e-2, rtol=1e-2), "mismatch vs reference"
    assert y.shape == x.shape

    # Also exercise a non-divisible row count (21 rows) to hit the masked
    # ragged last block (no host-side padding copies anymore).
    x2 = jax.random.normal(jax.random.PRNGKey(1), (3, 7, hidden), dtype=jnp.float32)
    y2 = jax.block_until_ready(layer_normalization(x2, alpha, bias, eps=1e-6))
    mean2 = jnp.mean(x2, axis=-1, keepdims=True)
    std2 = jnp.std(x2, axis=-1, keepdims=True, ddof=1)
    ref2 = alpha * (x2 - mean2) / (std2 + 1e-6) + bias
    assert jnp.allclose(y2, ref2, atol=1e-2, rtol=1e-2), "mismatch vs reference (ragged)"
    assert y2.shape == x2.shape

    print("KERNEL_OK")
</pallas_src>

<mosaic_0001>
module attributes {stable_mosaic.version = 11 : i64} {
  func.func @_layernorm_kernel(%arg0: i32, %arg1: memref<16x128xf32, #tpu.memory_space<vmem>>, %arg2: memref<1x128xf32, #tpu.memory_space<vmem>>, %arg3: memref<1x128xf32, #tpu.memory_space<vmem>>, %arg4: memref<16x128xf32, #tpu.memory_space<vmem>>) attributes {dimension_semantics = [#tpu.dimension_semantics<parallel>], iteration_bounds = array<i64: 1>, scalar_prefetch = 0 : i64, scratch_operands = 0 : i64, tpu.core_type = #tpu.core_type<tc>, window_params = [{transform_indices = @transform_0, window_bounds = array<i64: 16, 128>}, {pipeline_mode = #tpu.pipeline_mode<synchronous>, transform_indices = @transform_1, window_bounds = array<i64: 1, 128>}, {pipeline_mode = #tpu.pipeline_mode<synchronous>, transform_indices = @transform_2, window_bounds = array<i64: 1, 128>}, {transform_indices = @transform_3, window_bounds = array<i64: 16, 128>}]} {
    %c0 = arith.constant 0 : index
    %c0_0 = arith.constant 0 : index
    %0 = vector.load %arg1[%c0, %c0_0] : memref<16x128xf32, #tpu.memory_space<vmem>>, vector<16x128xf32>
    %cst = arith.constant dense<0.000000e+00> : vector<16xf32>
    %1 = vector.multi_reduction <add>, %0, %cst [1] : vector<16x128xf32> to vector<16xf32>
    %2 = vector.shape_cast %1 : vector<16xf32> to vector<16x1xf32>
    %cst_1 = arith.constant 1.280000e+02 : f32
    %3 = vector.broadcast %cst_1 : f32 to vector<16x1xf32>
    %4 = arith.divf %2, %3 : vector<16x1xf32>
    %5 = vector.broadcast %4 : vector<16x1xf32> to vector<16x128xf32>
    %6 = arith.subf %0, %5 : vector<16x128xf32>
    %7 = arith.mulf %6, %6 : vector<16x128xf32>
    %cst_2 = arith.constant dense<0.000000e+00> : vector<16xf32>
    %8 = vector.multi_reduction <add>, %7, %cst_2 [1] : vector<16x128xf32> to vector<16xf32>
    %9 = vector.shape_cast %8 : vector<16xf32> to vector<16x1xf32>
    %cst_3 = arith.constant 0.00787401571 : f32
    %10 = vector.broadcast %cst_3 : f32 to vector<16x1xf32>
    %11 = arith.mulf %9, %10 : vector<16x1xf32>
    %12 = math.sqrt %11 : vector<16x1xf32>
    %cst_4 = arith.constant 9.99999997E-7 : f32
    %13 = vector.broadcast %cst_4 : f32 to vector<16x1xf32>
    %14 = arith.addf %12, %13 : vector<16x1xf32>
    %15 = tpu.reciprocal %14 {approx = true} : vector<16x1xf32> -> vector<16x1xf32>
    %c0_5 = arith.constant 0 : index
    %c0_6 = arith.constant 0 : index
    %16 = vector.load %arg2[%c0_5, %c0_6] : memref<1x128xf32, #tpu.memory_space<vmem>>, vector<1x128xf32>
    %c0_7 = arith.constant 0 : index
    %c0_8 = arith.constant 0 : index
    %17 = vector.load %arg3[%c0_7, %c0_8] : memref<1x128xf32, #tpu.memory_space<vmem>>, vector<1x128xf32>
    %18 = vector.broadcast %15 : vector<16x1xf32> to vector<16x128xf32>
    %19 = arith.mulf %6, %18 : vector<16x128xf32>
    %20 = vector.broadcast %16 : vector<1x128xf32> to vector<16x128xf32>
    %21 = arith.mulf %19, %20 : vector<16x128xf32>
    %22 = vector.broadcast %17 : vector<1x128xf32> to vector<16x128xf32>
    %23 = arith.addf %21, %22 : vector<16x128xf32>
    %c0_9 = arith.constant 0 : index
    %c0_10 = arith.constant 0 : index
    %24 = vector.load %arg4[%c0_9, %c0_10] : memref<16x128xf32, #tpu.memory_space<vmem>>, vector<16x128xf32>
    tpu.vector_store %arg4[%c0_9, %c0_10], %23 {strides = array<i32>} : memref<16x128xf32, #tpu.memory_space<vmem>>, vector<16x128xf32>,
    return
  }
  func.func @transform_0(%arg0: i32) -> (i32, i32) {
    %c0_i32 = arith.constant 0 : i32
    %c0_i32_0 = arith.constant 0 : i32
    return %arg0, %c0_i32 : i32, i32
  }
  func.func @transform_1(%arg0: i32) -> (i32, i32) {
    %c0_i32 = arith.constant 0 : i32
    %c0_i32_0 = arith.constant 0 : i32
    %c0_i32_1 = arith.constant 0 : i32
    return %c0_i32, %c0_i32_0 : i32, i32
  }
  func.func @transform_2(%arg0: i32) -> (i32, i32) {
    %c0_i32 = arith.constant 0 : i32
    %c0_i32_0 = arith.constant 0 : i32
    %c0_i32_1 = arith.constant 0 : i32
    return %c0_i32, %c0_i32_0 : i32, i32
  }
  func.func @transform_3(%arg0: i32) -> (i32, i32) {
    %c0_i32 = arith.constant 0 : i32
    %c0_i32_0 = arith.constant 0 : i32
    return %arg0, %c0_i32 : i32, i32
  }
}

</mosaic_0001>

<llo_original>
// kernel: tpu_custom_call.1
$region0: #{tpu_custom_call.1}
  #allocation0 [shape = 'u32[]', space=smem, size = 0x4, offset = 0x4, fixed_abs, tag = 'smem constant byte address 0x4 - core index']
  #allocation1 [shape = 'u32[144,128]{1,0:T(1,128)}', space=vmem, size = 0x12000, scoped, tag = 'internal scratch']
  %s0 = inlined_call_operand.hbm [shape: f32[16,128], index: 0, kind: input, shape index: {}]
  %s1 = inlined_call_operand.vmem [shape: f32[1,128], index: 1, kind: input, shape index: {}]
  %s2 = inlined_call_operand.vmem [shape: f32[1,128], index: 2, kind: input, shape index: {}]
  %s3 = inlined_call_operand.hbm [shape: f32[16,128], index: 3, kind: output, shape index: {}]
  %s4 = sld [smem:[#allocation0]]
  $region26: #{tpu_custom_call.1} parent=0
    _
  %s6 = ssub.s32 1, %s4
  %s7 = scalar_select 0, %s6, %s4
  $region1: #{tpu_custom_call.1} parent=0
    #allocation2 [shape = 'u8[8192]{0}', space=vmem, size = 0x2000, scoped, tag = 'input window, operand 0, single buffered']
    #allocation3 [shape = 's32[1]{0}', space=sflag, size = 0x4, scoped, tag = 'scoped memory for tpu_custom_call.1']
    #allocation4 [shape = 's32[1]{0}', space=sflag, size = 0x4, scoped, tag = 'scoped memory for tpu_custom_call.1']
    #allocation5 [shape = 'u8[8192]{0}', space=vmem, size = 0x2000, scoped, tag = 'output window, operand 0, single buffered']
    %8 = vsyncpa [#allocation3], 0
    %9 = vsyncpa [#allocation4], 0
    // Predicated region
    $region2: #{tpu_custom_call.1} parent=1 // pred_check
      _
    $region3: #{tpu_custom_call.1} parent=1 // pred_check_branch
      %11 = sbr.rel (0) target = $region5
    $region4: #{tpu_custom_call.1} parent=1 // pred_region
      %s13 = ssub.s32 256, 256
      %14 = vsyncadd [#allocation3], %s13
      %s15 = sshll.u32 [#allocation2], 4
      %s16 = int_to_ptr.vmem [resolvable:$true] %s15
      %21 = dma.hbm_to_vmem [thread:$0]  %s0, 256, %s16, [#allocation3], 128, 128, 8
    $region5: #{tpu_custom_call.1} parent=1 // pred_fallthru
      _
    // Predicated region
    $region6: #{tpu_custom_call.1} parent=1 // pred_check
      _
    $region7: #{tpu_custom_call.1} parent=1 // pred_check_branch
      %23 = sbr.rel (0) target = $region9
    $region8: #{tpu_custom_call.1} parent=1 // pred_region
      _
    $region9: #{tpu_custom_call.1} parent=1 // pred_fallthru
      _
    // Predicated region
    $region10: #{tpu_custom_call.1} parent=1 // pred_check
      _
    $region11: #{tpu_custom_call.1} parent=1 // pred_check_branch
      %25 = sbr.rel (0) target = $region13
    $region12: #{tpu_custom_call.1} parent=1 // pred_region
      _
    $region13: #{tpu_custom_call.1} parent=1 // pred_fallthru
      _
    // Predicated region
    $region14: #{tpu_custom_call.1} parent=1 // pred_check
      _
    $region15: #{tpu_custom_call.1} parent=1 // pred_check_branch
      %27 = sbr.rel (0) target = $region17
    $region16: #{tpu_custom_call.1} parent=1 // pred_region
      %28 = dma.done [#allocation3], 256
    $region17: #{tpu_custom_call.1} parent=1 // pred_fallthru
      _
    %v29 = vld [vmem:[#allocation2] sm:$0xff]
    %v30 = vld [vmem:[#allocation2 + $0x8] sm:$0xff]
    %31 = vadd.xlane.f32.xlu0 %v29
    %v32 = vpop.xlane.xlu0 %31
    %33 = vadd.xlane.f32.xlu0 %v30
    %v34 = vpop.xlane.xlu0 %33
    %v35 = vrcp.pop 128.0
    %v36 = vmul.f32 %v32, %v35
    %v37 = vmul.f32 %v34, %v35
    %v38 = vsub.f32 %v29, %v36
    %v39 = vsub.f32 %v30, %v37
    %v40 = vmul.f32 %v38, %v38
    %v41 = vmul.f32 %v39, %v39
    %42 = vadd.xlane.f32.xlu0 %v40
    %v43 = vpop.xlane.xlu0 %42
    %44 = vadd.xlane.f32.xlu0 %v41
    %v45 = vpop.xlane.xlu0 %44
    %v46 = vmul.f32 %v43, 0.007874016
    %v47 = vmul.f32 %v45, 0.007874016
    %v48 = vrsqrt.pop %v46
    %v49 = vmul.f32 %v46, %v48
    %vm50 = vcmp.eq.f32.partialorder %v46, inf
    %v51 = vsel %vm50, %v46, %v49
    %vm52 = vcmp.eq.f32.partialorder %v46, 0.0
    %v53 = vand.u32 %v46, 2147483648
    %v54 = vsel %vm52, %v53, %v51
    %v55 = vrsqrt.pop %v47
    %v56 = vmul.f32 %v47, %v55
    %vm57 = vcmp.eq.f32.partialorder %v47, inf
    %v58 = vsel %vm57, %v47, %v56
    %vm59 = vcmp.eq.f32.partialorder %v47, 0.0
    %v60 = vand.u32 %v47, 2147483648
    %v61 = vsel %vm59, %v60, %v58
    %v62 = vadd.f32 %v54, 1e-06
    %v63 = vadd.f32 %v61, 1e-06
    %v64 = vrcp.pop %v62
    %v65 = vrcp.pop %v63
    %v66 = vld [vmem:[%s1] sm:$0x1]
    %v67 = vld [vmem:[%s2] sm:$0x1]
    %v68 = vmul.f32 %v38, %v64
    %v69 = vmul.f32 %v39, %v65
    %v71 = vlaneseq
    %v72 = vshrl.u32 %v71, 7
    %v73 = vsub.s32 0, %v72
    %v74 = vrot.slane %v66, %v73
    %v76 = vmul.f32 %v68, %v74
    %v77 = vmul.f32 %v69, %v74
    %v79 = vlaneseq
    %v80 = vshrl.u32 %v79, 7
    %v81 = vsub.s32 0, %v80
    %v82 = vrot.slane %v67, %v81
    %v84 = vadd.f32 %v76, %v82
    %v85 = vadd.f32 %v77, %v82
    %86 = vst [vmem:[#allocation5] sm:$0xff] %v84
    %87 = vst [vmem:[#allocation5 + $0x8] sm:$0xff] %v85
    // Predicated region
    $region18: #{tpu_custom_call.1} parent=1 // pred_check
      _
    $region19: #{tpu_custom_call.1} parent=1 // pred_check_branch
      %89 = sbr.rel (0) target = $region21
    $region20: #{tpu_custom_call.1} parent=1 // pred_region
      %s91 = ssub.s32 256, 256
      %92 = vsyncadd [#allocation4], %s91
      %s93 = sshll.u32 [#allocation5], 4
      %s94 = int_to_ptr.vmem [resolvable:$true] %s93
      %99 = dma.vmem_to_hbm [thread:$0]  %s94, 256, %s3, [#allocation4], 128, 128, 8
    $region21: #{tpu_custom_call.1} parent=1 // pred_fallthru
      _
    // Predicated region
    $region22: #{tpu_custom_call.1} parent=1 // pred_check
      _
    $region23: #{tpu_custom_call.1} parent=1 // pred_check_branch
      %101 = sbr.rel (0) target = $region25
    $region24: #{tpu_custom_call.1} parent=1 // pred_region
      %102 = dma.done [#allocation4], 256
    $region25: #{tpu_custom_call.1} parent=1 // pred_fallthru
      _
    %103 = vsyncpa [#allocation3], 1
    %104 = vsyncpa [#allocation4], 1

</llo_original>
